<compile_context>
chip_gen: v5e
topology: v5e:2x2
jax: 0.10.0
libtpu: 0.0.40
codegen_flags: <defaults>
</compile_context>

<pallas_src>
import jax
import jax.numpy as jnp
from jax.experimental import pallas as pl
from jax.experimental.pallas import tpu as pltpu


def _add_kernel(x_ref, y_ref, o_ref):
    o_ref[...] = x_ref[...] + y_ref[...]


# ~2 MiB per block: in the measured 1-4 MiB sweet spot (>=85% of HBM roofline
# on v6e) and safe under every chip's default scoped-VMEM limit.
_TARGET_BLOCK_BYTES = 2 * 1024 * 1024
# Below this, kernel-launch + per-step pipeline overhead dominates; XLA's
# fused add is strictly faster.
_SMALL_INPUT_BYTES = 1 * 1024 * 1024


def _pallas_add_2d(x2: jax.Array, y2: jax.Array, tm: int) -> jax.Array:
    rows, w = x2.shape
    grid_m = pl.cdiv(rows, tm)  # partial last block is handled automatically
    return pl.pallas_call(
        _add_kernel,
        out_shape=jax.ShapeDtypeStruct((rows, w), x2.dtype),
        grid=(grid_m,),
        in_specs=[
            pl.BlockSpec((tm, w), lambda i: (i, 0)),
            pl.BlockSpec((tm, w), lambda i: (i, 0)),
        ],
        out_specs=pl.BlockSpec((tm, w), lambda i: (i, 0)),
        compiler_params=pltpu.CompilerParams(
            dimension_semantics=("parallel",)
        ),
    )(x2, y2)


def pallas_add(x: jax.Array, y: jax.Array, *, force_pallas: bool = False) -> jax.Array:
    """Elementwise add via a Pallas TPU kernel (FloatFunctional.add semantics)."""
    out_shape = jnp.broadcast_shapes(x.shape, y.shape)
    out_dtype = jnp.result_type(x.dtype, y.dtype)

    # Broadcasting path: never materialize broadcast_to in HBM — XLA fuses
    # broadcast+add into a single pass, which is already roofline-optimal.
    if x.shape != y.shape:
        return x.astype(out_dtype) + y.astype(out_dtype)

    if x.dtype != out_dtype:
        x = x.astype(out_dtype)
    if y.dtype != out_dtype:
        y = y.astype(out_dtype)

    n = int(x.size)
    itemsize = jnp.dtype(out_dtype).itemsize

    # Small-input fast path (gated so tests can still force the kernel path).
    if n == 0 or (not force_pallas and n * itemsize < _SMALL_INPUT_BYTES):
        return x + y

    LANES = 128
    xf = x.reshape(-1)
    yf = y.reshape(-1)

    if n % LANES == 0:
        # Aligned fast path: zero padding passes. Pick the widest lane dim
        # (multiple of 128) that divides n, for unmasked wide stores and
        # fewer, longer DMA descriptors.
        n_pad = n
        w = next(width for width in (1024, 512, 256, 128) if n % width == 0)
    else:
        # Unaligned: one pad pass is unavoidable; pad straight to W=1024.
        w = 1024
        n_pad = pl.cdiv(n, w) * w
        xf = jnp.pad(xf, (0, n_pad - n))
        yf = jnp.pad(yf, (0, n_pad - n))

    rows = n_pad // w
    x2 = xf.reshape(rows, w)
    y2 = yf.reshape(rows, w)

    # Row-tile sized for ~2 MiB blocks; multiple of 8 sublanes, or the full
    # row extent when the whole slab already fits in one block.
    tm_target = max(8, (_TARGET_BLOCK_BYTES // (w * itemsize)) // 8 * 8)
    tm = rows if rows <= tm_target else tm_target

    out2 = _pallas_add_2d(x2, y2, tm)

    if n_pad != n:
        # Only the unaligned path pays the trailing-slice pass.
        return out2.reshape(-1)[:n].reshape(out_shape)
    return out2.reshape(out_shape)


if __name__ == "__main__":
    key = jax.random.PRNGKey(0)
    kx, ky = jax.random.split(key)
    # Small NCHW-style inputs, consistent with typical use of Add.
    x = jax.random.normal(kx, (2, 4, 16, 16), dtype=jnp.float32)
    y = jax.random.normal(ky, (2, 4, 16, 16), dtype=jnp.float32)

    # force_pallas=True so the Pallas kernel itself runs even at this tiny
    # size (production callers get the small-input / broadcast fast paths).
    out = pallas_add(x, y, force_pallas=True)
    out = jax.block_until_ready(out)

    ref = x + y
    assert out.shape == ref.shape and out.dtype == ref.dtype
    assert jnp.allclose(out, ref, atol=1e-6, rtol=1e-6)

    print("KERNEL_OK")
</pallas_src>

<mosaic_0001>
module attributes {stable_mosaic.version = 11 : i64} {
  func.func @_add_kernel(%arg0: i32, %arg1: memref<2x1024xf32, #tpu.memory_space<vmem>>, %arg2: memref<2x1024xf32, #tpu.memory_space<vmem>>, %arg3: memref<2x1024xf32, #tpu.memory_space<vmem>>) attributes {dimension_semantics = [#tpu.dimension_semantics<parallel>], iteration_bounds = array<i64: 1>, scalar_prefetch = 0 : i64, scratch_operands = 0 : i64, tpu.core_type = #tpu.core_type<tc>, window_params = [{transform_indices = @transform_0, window_bounds = array<i64: 2, 1024>}, {transform_indices = @transform_1, window_bounds = array<i64: 2, 1024>}, {transform_indices = @transform_2, window_bounds = array<i64: 2, 1024>}]} {
    %c0 = arith.constant 0 : index
    %c0_0 = arith.constant 0 : index
    %0 = vector.load %arg1[%c0, %c0_0] : memref<2x1024xf32, #tpu.memory_space<vmem>>, vector<2x1024xf32>
    %c0_1 = arith.constant 0 : index
    %c0_2 = arith.constant 0 : index
    %1 = vector.load %arg2[%c0_1, %c0_2] : memref<2x1024xf32, #tpu.memory_space<vmem>>, vector<2x1024xf32>
    %2 = arith.addf %0, %1 : vector<2x1024xf32>
    %c0_3 = arith.constant 0 : index
    %c0_4 = arith.constant 0 : index
    %3 = vector.load %arg3[%c0_3, %c0_4] : memref<2x1024xf32, #tpu.memory_space<vmem>>, vector<2x1024xf32>
    tpu.vector_store %arg3[%c0_3, %c0_4], %2 {strides = array<i32>} : memref<2x1024xf32, #tpu.memory_space<vmem>>, vector<2x1024xf32>,
    return
  }
  func.func @transform_0(%arg0: i32) -> (i32, i32) {
    %c0_i32 = arith.constant 0 : i32
    %c0_i32_0 = arith.constant 0 : i32
    return %arg0, %c0_i32 : i32, i32
  }
  func.func @transform_1(%arg0: i32) -> (i32, i32) {
    %c0_i32 = arith.constant 0 : i32
    %c0_i32_0 = arith.constant 0 : i32
    return %arg0, %c0_i32 : i32, i32
  }
  func.func @transform_2(%arg0: i32) -> (i32, i32) {
    %c0_i32 = arith.constant 0 : i32
    %c0_i32_0 = arith.constant 0 : i32
    return %arg0, %c0_i32 : i32, i32
  }
}

</mosaic_0001>

<llo_original>
// kernel: tpu_custom_call.1
$region0: #{tpu_custom_call.1}
  #allocation0 [shape = 'u32[]', space=smem, size = 0x4, offset = 0x4, fixed_abs, tag = 'smem constant byte address 0x4 - core index']
  #allocation1 [shape = 'u32[72,128]{1,0:T(1,128)}', space=vmem, size = 0x9000, scoped, tag = 'internal scratch']
  %s0 = inlined_call_operand.hbm [shape: f32[2,1024], index: 0, kind: input, shape index: {}]
  %s1 = inlined_call_operand.hbm [shape: f32[2,1024], index: 1, kind: input, shape index: {}]
  %s2 = inlined_call_operand.hbm [shape: f32[2,1024], index: 2, kind: output, shape index: {}]
  %s3 = sld [smem:[#allocation0]]
  $region26: #{tpu_custom_call.1} parent=0
    _
  %s5 = ssub.s32 1, %s3
  %s6 = scalar_select 0, %s5, %s3
  $region1: #{tpu_custom_call.1} parent=0
    #allocation2 [shape = 'u8[8192]{0}', space=vmem, size = 0x2000, scoped, tag = 'input window, operand 0, single buffered']
    #allocation3 [shape = 's32[1]{0}', space=sflag, size = 0x4, scoped, tag = 'scoped memory for tpu_custom_call.1']
    #allocation4 [shape = 's32[1]{0}', space=sflag, size = 0x4, scoped, tag = 'scoped memory for tpu_custom_call.1']
    #allocation5 [shape = 'u8[8192]{0}', space=vmem, size = 0x2000, scoped, tag = 'input window, operand 1, single buffered']
    #allocation6 [shape = 's32[1]{0}', space=sflag, size = 0x4, scoped, tag = 'scoped memory for tpu_custom_call.1']
    #allocation7 [shape = 'u8[8192]{0}', space=vmem, size = 0x2000, scoped, tag = 'output window, operand 0, single buffered']
    %7 = vsyncpa [#allocation3], 0
    %8 = vsyncpa [#allocation6], 0
    %9 = vsyncpa [#allocation4], 0
    // Predicated region
    $region2: #{tpu_custom_call.1} parent=1 // pred_check
      _
    $region3: #{tpu_custom_call.1} parent=1 // pred_check_branch
      %11 = sbr.rel (0) target = $region5
    $region4: #{tpu_custom_call.1} parent=1 // pred_region
      %13 = vsyncadd [#allocation3], 0
      %s15 = sshll.u32 %s0, 4
      %s16 = int_to_ptr.hbm [resolvable:$true] %s15
      %s17 = sshll.u32 [#allocation2], 4
      %s18 = int_to_ptr.vmem [resolvable:$true] %s17
      %20 = dma.hbm_to_vmem [thread:$0]  %s16, 256, %s18, [#allocation3]
    $region5: #{tpu_custom_call.1} parent=1 // pred_fallthru
      _
    // Predicated region
    $region6: #{tpu_custom_call.1} parent=1 // pred_check
      _
    $region7: #{tpu_custom_call.1} parent=1 // pred_check_branch
      %22 = sbr.rel (0) target = $region9
    $region8: #{tpu_custom_call.1} parent=1 // pred_region
      %24 = vsyncadd [#allocation6], 0
      %s26 = sshll.u32 %s1, 4
      %s27 = int_to_ptr.hbm [resolvable:$true] %s26
      %s28 = sshll.u32 [#allocation5], 4
      %s29 = int_to_ptr.vmem [resolvable:$true] %s28
      %31 = dma.hbm_to_vmem [thread:$0]  %s27, 256, %s29, [#allocation6]
    $region9: #{tpu_custom_call.1} parent=1 // pred_fallthru
      _
    // Predicated region
    $region10: #{tpu_custom_call.1} parent=1 // pred_check
      _
    $region11: #{tpu_custom_call.1} parent=1 // pred_check_branch
      %33 = sbr.rel (0) target = $region13
    $region12: #{tpu_custom_call.1} parent=1 // pred_region
      %35 = dma.done [#allocation3], 256
    $region13: #{tpu_custom_call.1} parent=1 // pred_fallthru
      _
    // Predicated region
    $region14: #{tpu_custom_call.1} parent=1 // pred_check
      _
    $region15: #{tpu_custom_call.1} parent=1 // pred_check_branch
      %37 = sbr.rel (0) target = $region17
    $region16: #{tpu_custom_call.1} parent=1 // pred_region
      %39 = dma.done [#allocation6], 256
    $region17: #{tpu_custom_call.1} parent=1 // pred_fallthru
      _
    %v40 = vld [vmem:[#allocation2] sm:$0xff]
    %v41 = vld [vmem:[#allocation2 + $0x8] sm:$0xff]
    %v42 = vld [vmem:[#allocation5] sm:$0xff]
    %v43 = vld [vmem:[#allocation5 + $0x8] sm:$0xff]
    %v44 = vadd.f32 %v40, %v42
    %v45 = vadd.f32 %v41, %v43
    %46 = vst [vmem:[#allocation7] sm:$0xff] %v44
    %47 = vst [vmem:[#allocation7 + $0x8] sm:$0xff] %v45
    // Predicated region
    $region18: #{tpu_custom_call.1} parent=1 // pred_check
      _
    $region19: #{tpu_custom_call.1} parent=1 // pred_check_branch
      %49 = sbr.rel (0) target = $region21
    $region20: #{tpu_custom_call.1} parent=1 // pred_region
      %51 = vsyncadd [#allocation4], 0
      %s53 = sshll.u32 [#allocation7], 4
      %s54 = int_to_ptr.vmem [resolvable:$true] %s53
      %s55 = sshll.u32 %s2, 4
      %s56 = int_to_ptr.hbm [resolvable:$true] %s55
      %58 = dma.vmem_to_hbm [thread:$0]  %s54, 256, %s56, [#allocation4]
    $region21: #{tpu_custom_call.1} parent=1 // pred_fallthru
      _
    // Predicated region
    $region22: #{tpu_custom_call.1} parent=1 // pred_check
      _
    $region23: #{tpu_custom_call.1} parent=1 // pred_check_branch
      %60 = sbr.rel (0) target = $region25
    $region24: #{tpu_custom_call.1} parent=1 // pred_region
      %62 = dma.done [#allocation4], 256
    $region25: #{tpu_custom_call.1} parent=1 // pred_fallthru
      _
    %63 = vsyncpa [#allocation3], 1
    %64 = vsyncpa [#allocation6], 1
    %65 = vsyncpa [#allocation4], 1

</llo_original>
